<compile_context>
chip_gen: v5e
topology: v5e:2x2
jax: 0.10.0
libtpu: 0.0.40
codegen_flags: <defaults>
</compile_context>

<pallas_src>
import jax
import jax.numpy as jnp
from jax.experimental import pallas as pl
from jax.experimental.pallas import tpu as pltpu

_LANES = 128
_ROW_PACK = 16  # keep row counts multiples of 16 -> blocks legal for f32 & bf16


def _round_up(x, m):
    return -(-x // m) * m


def _make_kl_kernel(*, n_valid, seq_len, latent_dim, rb, inv_bs):
    period = float(seq_len * latent_dim)   # S * D
    inv_period = 1.0 / period
    d_lo = float(latent_dim)
    d_hi = float(2 * latent_dim)
    tile_elems = rb * _LANES

    def kernel(pm_ref, ps_ref, qm_ref, qs_ref, out_ref, acc_ref):
        step = pl.program_id(0)

        @pl.when(step == 0)
        def _init():
            acc_ref[0] = jnp.float32(0.0)

        pm = pm_ref[...].astype(jnp.float32)   # prior_mu
        ps = ps_ref[...].astype(jnp.float32)   # prior_sigma
        qm = qm_ref[...].astype(jnp.float32)   # posterior_mu
        qs = qs_ref[...].astype(jnp.float32)   # posterior_sigma

        # Flattened element index of every lane (exact in f32: total < 2**24).
        r_idx = jax.lax.broadcasted_iota(jnp.int32, (rb, _LANES), 0)
        c_idx = jax.lax.broadcasted_iota(jnp.int32, (rb, _LANES), 1)
        flat = ((step * tile_elems).astype(jnp.float32)
                + (r_idx * _LANES + c_idx).astype(jnp.float32))

        # u = flat mod (S*D), via exact f32 floor-div + +/-period fixup
        # (avoids vector integer div/mod).
        q = jnp.floor(flat * inv_period)
        u = flat - q * period
        u = jnp.where(u < 0.0, u + period, u)
        u = jnp.where(u >= period, u - period, u)

        valid = flat < float(n_valid)
        is_t0 = u < d_lo                      # original time index == 0
        is_t1 = (u >= d_lo) & (u < d_hi)      # original time index == 1

        rp = 1.0 / ps        # reused: log ratio AND 1/(2*prior_var) = 0.5*rp*rp
        qs2 = qs * qs
        dmu = qm - pm

        # Single log per element:
        #   t >= 2: -log(qs/ps)    = log(prior_sigma) - log(posterior_sigma)
        #   t == 1: -log(qs*qs/ps) = same, plus first_kl's
        #                            -log(posterior_sigma[:, 1]) folded in.
        log_arg = qs * rp * jnp.where(is_t1, qs, 1.0)
        tail = (-jnp.log(log_arg) - 0.5
                + (qs2 + dmu * dmu) * (0.5 * (rp * rp))
                + jnp.where(is_t1, 0.5 * qs2, 0.0))

        # t == 0 slot carries the remaining first_kl pieces. NOTE (quirk kept
        # on purpose): the reference pairs posterior_sigma at original t=1
        # with posterior_mu at original t=0; the mu part lands here, the sigma
        # part is folded into the t==1 branch above.
        head = 0.5 * (qm * qm) - 0.5

        elem = jnp.where(valid, jnp.where(is_t0, head, tail), 0.0)
        acc_ref[0] += jnp.sum(elem)

        @pl.when(step == pl.num_programs(0) - 1)
        def _finalize():
            out_ref[0, 0] = acc_ref[0] * jnp.float32(inv_bs)

    return kernel


def probabilistic_loss(prior_mu, prior_sigma, posterior_mu, posterior_sigma,
                       *, row_block=512):
    """KL(posterior || prior) with MILE's first-timestep quirk -> scalar."""
    B, S, D = prior_mu.shape
    if S < 2:
        raise ValueError("ProbabilisticLoss needs at least 2 timesteps")
    n = B * S * D

    rows = _round_up(_round_up(n, _LANES) // _LANES, _ROW_PACK)
    rb = _round_up(min(row_block, rows), _ROW_PACK)
    padded_rows = _round_up(rows, rb)
    total = padded_rows * _LANES
    grid = padded_rows // rb

    # In-kernel index math is done in f32 (exact below 2**24 elements).
    # TODO(synk): switch to int32 div/mod (or explicit time-axis tiling) if
    # this loss is ever evaluated on >16M latent elements in one call.
    assert total + S * D < (1 << 24), "tensor too large for f32 index math"

    def _prep(x, pad_value):
        flat = jnp.reshape(x, (-1,))
        if total != n:
            flat = jnp.pad(flat, (0, total - n), constant_values=pad_value)
        return jnp.reshape(flat, (padded_rows, _LANES))

    pm = _prep(prior_mu, 0.0)
    ps = _prep(prior_sigma, 1.0)    # sigmas padded with 1 -> log/recip stay finite
    qm = _prep(posterior_mu, 0.0)
    qs = _prep(posterior_sigma, 1.0)

    kernel = _make_kl_kernel(n_valid=n, seq_len=S, latent_dim=D, rb=rb,
                             inv_bs=1.0 / float(B * S))
    tile = pl.BlockSpec((rb, _LANES), lambda i: (i, 0))

    out = pl.pallas_call(
        kernel,
        out_shape=jax.ShapeDtypeStruct((1, 1), jnp.float32),
        grid=(grid,),
        in_specs=[tile, tile, tile, tile],
        out_specs=pl.BlockSpec(memory_space=pltpu.MemorySpace.SMEM),
        scratch_shapes=[pltpu.SMEM((1,), jnp.float32)],
        compiler_params=pltpu.CompilerParams(
            # The single grid axis carries the running sum -> must stay
            # "arbitrary".
            # TODO(synk): per-block partial sums + "parallel" to light up both
            # v7x TensorCores once this loss runs at model scale.
            dimension_semantics=("arbitrary",),
        ),
    )(pm, ps, qm, qs)
    return out[0, 0]


def probabilistic_loss_ref(prior_mu, prior_sigma, posterior_mu, posterior_sigma):
    """Pure-JAX reference mirroring the PyTorch forward exactly."""
    posterior_var = posterior_sigma[:, 1:] ** 2
    prior_var = prior_sigma[:, 1:] ** 2
    posterior_log_sigma = jnp.log(posterior_sigma[:, 1:])
    prior_log_sigma = jnp.log(prior_sigma[:, 1:])
    kl_div = (prior_log_sigma - posterior_log_sigma - 0.5
              + (posterior_var + (posterior_mu[:, 1:] - prior_mu[:, 1:]) ** 2)
              / (2 * prior_var))
    first_kl = (-posterior_log_sigma[:, :1] - 0.5
                + (posterior_var[:, :1] + posterior_mu[:, :1] ** 2) / 2)
    kl_div = jnp.concatenate([first_kl, kl_div], axis=1)
    return jnp.mean(jnp.sum(kl_div, axis=-1))


def _make_inputs(key, shape):
    k1, k2, k3, k4 = jax.random.split(key, 4)
    prior_mu = jax.random.normal(k1, shape, dtype=jnp.float32)
    posterior_mu = jax.random.normal(k2, shape, dtype=jnp.float32)
    # sigmas must be strictly positive (log / division).
    prior_sigma = jnp.exp(0.3 * jax.random.normal(k3, shape, dtype=jnp.float32))
    posterior_sigma = jnp.exp(0.3 * jax.random.normal(k4, shape, dtype=jnp.float32))
    return prior_mu, prior_sigma, posterior_mu, posterior_sigma


if __name__ == "__main__":
    key = jax.random.PRNGKey(0)
    k_a, k_b = jax.random.split(key, 2)

    # 1) Shape from the module spec: batch=2, seq=8, latent=32 (single tile).
    args = _make_inputs(k_a, (2, 8, 32))
    loss = jax.block_until_ready(probabilistic_loss(*args))
    ref = probabilistic_loss_ref(*args)
    assert jnp.allclose(loss, ref, rtol=1e-5, atol=1e-5), (loss, ref)

    # 2) Non-power-of-two dims + grid > 1 (multi-step SMEM accumulation path).
    args2 = _make_inputs(k_b, (2, 9, 160))
    loss2 = jax.block_until_ready(probabilistic_loss(*args2, row_block=16))
    ref2 = probabilistic_loss_ref(*args2)
    assert jnp.allclose(loss2, ref2, rtol=1e-5, atol=1e-5), (loss2, ref2)

    print("KERNEL_OK")
</pallas_src>

<mosaic_0001>
module attributes {stable_mosaic.version = 11 : i64} {
  func.func @kernel(%arg0: i32, %arg1: memref<16x128xf32, #tpu.memory_space<vmem>>, %arg2: memref<16x128xf32, #tpu.memory_space<vmem>>, %arg3: memref<16x128xf32, #tpu.memory_space<vmem>>, %arg4: memref<16x128xf32, #tpu.memory_space<vmem>>, %arg5: memref<1x1xf32, #tpu.memory_space<smem>>, %arg6: memref<1xf32, #tpu.memory_space<smem>>) attributes {dimension_semantics = [#tpu.dimension_semantics<arbitrary>], iteration_bounds = array<i64: 1>, scalar_prefetch = 0 : i64, scratch_operands = 1 : i64, tpu.core_type = #tpu.core_type<tc>, window_params = [{transform_indices = @transform_0, window_bounds = array<i64: 16, 128>}, {transform_indices = @transform_1, window_bounds = array<i64: 16, 128>}, {transform_indices = @transform_2, window_bounds = array<i64: 16, 128>}, {transform_indices = @transform_3, window_bounds = array<i64: 16, 128>}, {transform_indices = @transform_4, window_bounds = array<i64: 1, 1>}]} {
    %c0_i32 = arith.constant 0 : i32
    %0 = arith.cmpi eq, %arg0, %c0_i32 : i32
    %1 = arith.extui %0 : i1 to i32
    %c0_i32_0 = arith.constant 0 : i32
    %2 = arith.cmpi ne, %1, %c0_i32_0 : i32
    scf.if %2 {
      %cst_32 = arith.constant 0.000000e+00 : f32
      %c0_33 = arith.constant 0 : index
      %85 = memref.load %arg6[%c0_33] : memref<1xf32, #tpu.memory_space<smem>>
      memref.store %cst_32, %arg6[%c0_33] : memref<1xf32, #tpu.memory_space<smem>>
    } else {
    }
    %c0 = arith.constant 0 : index
    %c0_1 = arith.constant 0 : index
    %3 = vector.load %arg1[%c0, %c0_1] : memref<16x128xf32, #tpu.memory_space<vmem>>, vector<16x128xf32>
    %c0_2 = arith.constant 0 : index
    %c0_3 = arith.constant 0 : index
    %4 = vector.load %arg2[%c0_2, %c0_3] : memref<16x128xf32, #tpu.memory_space<vmem>>, vector<16x128xf32>
    %c0_4 = arith.constant 0 : index
    %c0_5 = arith.constant 0 : index
    %5 = vector.load %arg3[%c0_4, %c0_5] : memref<16x128xf32, #tpu.memory_space<vmem>>, vector<16x128xf32>
    %c0_6 = arith.constant 0 : index
    %c0_7 = arith.constant 0 : index
    %6 = vector.load %arg4[%c0_6, %c0_7] : memref<16x128xf32, #tpu.memory_space<vmem>>, vector<16x128xf32>
    %7 = tpu.iota {dimensions = array<i32: 0>} : vector<16x128xi32>
    %8 = tpu.iota {dimensions = array<i32: 1>} : vector<16x128xi32>
    %c2048_i32 = arith.constant 2048 : i32
    %9 = arith.muli %arg0, %c2048_i32 : i32
    %10 = arith.sitofp %9 : i32 to f32
    %c128_i32 = arith.constant 128 : i32
    %11 = vector.broadcast %c128_i32 : i32 to vector<16x128xi32>
    %12 = arith.muli %7, %11 : vector<16x128xi32>
    %13 = arith.addi %12, %8 : vector<16x128xi32>
    %14 = arith.sitofp %13 : vector<16x128xi32> to vector<16x128xf32>
    %15 = vector.broadcast %10 : f32 to vector<16x128xf32>
    %16 = arith.addf %15, %14 : vector<16x128xf32>
    %cst = arith.constant 3.906250e-03 : f32
    %17 = vector.broadcast %cst : f32 to vector<16x128xf32>
    %18 = arith.mulf %16, %17 : vector<16x128xf32>
    %19 = math.floor %18 : vector<16x128xf32>
    %cst_8 = arith.constant 2.560000e+02 : f32
    %20 = vector.broadcast %cst_8 : f32 to vector<16x128xf32>
    %21 = arith.mulf %19, %20 : vector<16x128xf32>
    %22 = arith.subf %16, %21 : vector<16x128xf32>
    %cst_9 = arith.constant 0.000000e+00 : f32
    %23 = vector.broadcast %cst_9 : f32 to vector<16x128xf32>
    %24 = arith.cmpf olt, %22, %23 : vector<16x128xf32>
    %cst_10 = arith.constant 2.560000e+02 : f32
    %25 = vector.broadcast %cst_10 : f32 to vector<16x128xf32>
    %26 = arith.addf %22, %25 : vector<16x128xf32>
    %27 = arith.select %24, %26, %22 : vector<16x128xi1>, vector<16x128xf32>
    %cst_11 = arith.constant 2.560000e+02 : f32
    %28 = vector.broadcast %cst_11 : f32 to vector<16x128xf32>
    %29 = arith.cmpf oge, %27, %28 : vector<16x128xf32>
    %cst_12 = arith.constant 2.560000e+02 : f32
    %30 = vector.broadcast %cst_12 : f32 to vector<16x128xf32>
    %31 = arith.subf %27, %30 : vector<16x128xf32>
    %32 = arith.select %29, %31, %27 : vector<16x128xi1>, vector<16x128xf32>
    %cst_13 = arith.constant 5.120000e+02 : f32
    %33 = vector.broadcast %cst_13 : f32 to vector<16x128xf32>
    %34 = arith.cmpf olt, %16, %33 : vector<16x128xf32>
    %cst_14 = arith.constant 3.200000e+01 : f32
    %35 = vector.broadcast %cst_14 : f32 to vector<16x128xf32>
    %36 = arith.cmpf olt, %32, %35 : vector<16x128xf32>
    %cst_15 = arith.constant 3.200000e+01 : f32
    %37 = vector.broadcast %cst_15 : f32 to vector<16x128xf32>
    %38 = arith.cmpf oge, %32, %37 : vector<16x128xf32>
    %cst_16 = arith.constant 6.400000e+01 : f32
    %39 = vector.broadcast %cst_16 : f32 to vector<16x128xf32>
    %40 = arith.cmpf olt, %32, %39 : vector<16x128xf32>
    %41 = arith.andi %38, %40 : vector<16x128xi1>
    %cst_17 = arith.constant 1.000000e+00 : f32
    %42 = vector.broadcast %cst_17 : f32 to vector<16x128xf32>
    %43 = arith.divf %42, %4 : vector<16x128xf32>
    %44 = arith.mulf %6, %6 : vector<16x128xf32>
    %45 = arith.subf %5, %3 : vector<16x128xf32>
    %46 = arith.mulf %6, %43 : vector<16x128xf32>
    %cst_18 = arith.constant 1.000000e+00 : f32
    %47 = vector.broadcast %cst_18 : f32 to vector<16x128xf32>
    %48 = arith.select %41, %6, %47 : vector<16x128xi1>, vector<16x128xf32>
    %49 = arith.mulf %46, %48 : vector<16x128xf32>
    %50 = math.log %49 : vector<16x128xf32>
    %cst_19 = arith.constant 0.000000e+00 : f32
    %51 = vector.broadcast %cst_19 : f32 to vector<16x128xf32>
    %52 = arith.subf %51, %50 : vector<16x128xf32>
    %cst_20 = arith.constant 5.000000e-01 : f32
    %53 = vector.broadcast %cst_20 : f32 to vector<16x128xf32>
    %54 = arith.subf %52, %53 : vector<16x128xf32>
    %55 = arith.mulf %45, %45 : vector<16x128xf32>
    %56 = arith.addf %44, %55 : vector<16x128xf32>
    %57 = arith.mulf %43, %43 : vector<16x128xf32>
    %cst_21 = arith.constant 5.000000e-01 : f32
    %58 = vector.broadcast %cst_21 : f32 to vector<16x128xf32>
    %59 = arith.mulf %58, %57 : vector<16x128xf32>
    %60 = arith.mulf %56, %59 : vector<16x128xf32>
    %61 = arith.addf %54, %60 : vector<16x128xf32>
    %cst_22 = arith.constant 5.000000e-01 : f32
    %62 = vector.broadcast %cst_22 : f32 to vector<16x128xf32>
    %63 = arith.mulf %62, %44 : vector<16x128xf32>
    %cst_23 = arith.constant 0.000000e+00 : f32
    %64 = vector.broadcast %cst_23 : f32 to vector<16x128xf32>
    %65 = arith.select %41, %63, %64 : vector<16x128xi1>, vector<16x128xf32>
    %66 = arith.addf %61, %65 : vector<16x128xf32>
    %67 = arith.mulf %5, %5 : vector<16x128xf32>
    %cst_24 = arith.constant 5.000000e-01 : f32
    %68 = vector.broadcast %cst_24 : f32 to vector<16x128xf32>
    %69 = arith.mulf %68, %67 : vector<16x128xf32>
    %cst_25 = arith.constant 5.000000e-01 : f32
    %70 = vector.broadcast %cst_25 : f32 to vector<16x128xf32>
    %71 = arith.subf %69, %70 : vector<16x128xf32>
    %72 = arith.select %36, %71, %66 : vector<16x128xi1>, vector<16x128xf32>
    %cst_26 = arith.constant 0.000000e+00 : f32
    %73 = vector.broadcast %cst_26 : f32 to vector<16x128xf32>
    %74 = arith.select %34, %72, %73 : vector<16x128xi1>, vector<16x128xf32>
    %c0_27 = arith.constant 0 : index
    %75 = memref.load %arg6[%c0_27] : memref<1xf32, #tpu.memory_space<smem>>
    %76 = vector.shape_cast %74 : vector<16x128xf32> to vector<1x16x128xf32>
    %cst_28 = arith.constant dense<0.000000e+00> : vector<1xf32>
    %77 = vector.multi_reduction <add>, %76, %cst_28 [1, 2] : vector<1x16x128xf32> to vector<1xf32>
    %78 = vector.shape_cast %77 : vector<1xf32> to vector<1x1x1xf32>
    %79 = vector.extract %78[0, 0, 0] : f32 from vector<1x1x1xf32>
    %80 = arith.addf %75, %79 : f32
    %c0_29 = arith.constant 0 : index
    %81 = memref.load %arg6[%c0_29] : memref<1xf32, #tpu.memory_space<smem>>
    memref.store %80, %arg6[%c0_29] : memref<1xf32, #tpu.memory_space<smem>>
    %c0_i32_30 = arith.constant 0 : i32
    %82 = arith.cmpi eq, %arg0, %c0_i32_30 : i32
    %83 = arith.extui %82 : i1 to i32
    %c0_i32_31 = arith.constant 0 : i32
    %84 = arith.cmpi ne, %83, %c0_i32_31 : i32
    scf.if %84 {
      %c0_32 = arith.constant 0 : index
      %85 = memref.load %arg6[%c0_32] : memref<1xf32, #tpu.memory_space<smem>>
      %cst_33 = arith.constant 6.250000e-02 : f32
      %86 = arith.mulf %85, %cst_33 : f32
      %c0_34 = arith.constant 0 : index
      %c0_35 = arith.constant 0 : index
      %87 = memref.load %arg5[%c0_34, %c0_35] : memref<1x1xf32, #tpu.memory_space<smem>>
      memref.store %86, %arg5[%c0_34, %c0_35] : memref<1x1xf32, #tpu.memory_space<smem>>
    } else {
    }
    return
  }
  func.func @transform_0(%arg0: i32) -> (i32, i32) {
    %c0_i32 = arith.constant 0 : i32
    %c0_i32_0 = arith.constant 0 : i32
    return %arg0, %c0_i32 : i32, i32
  }
  func.func @transform_1(%arg0: i32) -> (i32, i32) {
    %c0_i32 = arith.constant 0 : i32
    %c0_i32_0 = arith.constant 0 : i32
    return %arg0, %c0_i32 : i32, i32
  }
  func.func @transform_2(%arg0: i32) -> (i32, i32) {
    %c0_i32 = arith.constant 0 : i32
    %c0_i32_0 = arith.constant 0 : i32
    return %arg0, %c0_i32 : i32, i32
  }
  func.func @transform_3(%arg0: i32) -> (i32, i32) {
    %c0_i32 = arith.constant 0 : i32
    %c0_i32_0 = arith.constant 0 : i32
    return %arg0, %c0_i32 : i32, i32
  }
  func.func @transform_4(%arg0: i32) -> (i32, i32) {
    %c0_i32 = arith.constant 0 : i32
    %c0_i32_0 = arith.constant 0 : i32
    %c0_i32_1 = arith.constant 0 : i32
    return %c0_i32, %c0_i32_0 : i32, i32
  }
}

</mosaic_0001>

<llo_original>
// kernel: tpu_custom_call.1
$region0: #{tpu_custom_call.1}
  #allocation0 [shape = 'u32[]', space=smem, size = 0x4, offset = 0x4, fixed_abs, tag = 'smem constant byte address 0x4 - core index']
  #allocation1 [shape = 'u32[72,128]{1,0:T(1,128)}', space=vmem, size = 0x9000, scoped, tag = 'internal scratch']
  #allocation2 [shape = 'f32[1]{0:T(128)}', space=smem, size = 0x200, scoped, tag = 'scratch operand']
  %s0 = inlined_call_operand.hbm [shape: f32[16,128], index: 0, kind: input, shape index: {}]
  %s1 = inlined_call_operand.hbm [shape: f32[16,128], index: 1, kind: input, shape index: {}]
  %s2 = inlined_call_operand.hbm [shape: f32[16,128], index: 2, kind: input, shape index: {}]
  %s3 = inlined_call_operand.hbm [shape: f32[16,128], index: 3, kind: input, shape index: {}]
  %s4 = inlined_call_operand.hbm [shape: f32[1,1], index: 4, kind: output, shape index: {}]
  %s5 = sld [smem:[#allocation0]]
  $region50: #{tpu_custom_call.1} parent=0
    _
  %s7 = ssub.s32 1, %s5
  %s8 = scalar_select 0, %s7, %s5
  $region1: #{tpu_custom_call.1} parent=0
    #allocation3 [shape = 'u8[8192]{0}', space=vmem, size = 0x2000, scoped, tag = 'input window, operand 0, single buffered']
    #allocation4 [shape = 's32[1]{0}', space=sflag, size = 0x4, scoped, tag = 'scoped memory for tpu_custom_call.1']
    #allocation5 [shape = 's32[1]{0}', space=sflag, size = 0x4, scoped, tag = 'scoped memory for tpu_custom_call.1']
    #allocation6 [shape = 'u8[8192]{0}', space=vmem, size = 0x2000, scoped, tag = 'input window, operand 1, single buffered']
    #allocation7 [shape = 's32[1]{0}', space=sflag, size = 0x4, scoped, tag = 'scoped memory for tpu_custom_call.1']
    #allocation8 [shape = 'u8[8192]{0}', space=vmem, size = 0x2000, scoped, tag = 'input window, operand 2, single buffered']
    #allocation9 [shape = 'u8[8192]{0}', space=vmem, size = 0x2000, scoped, tag = 'input window, operand 3, single buffered']
    #allocation10 [shape = 's32[1]{0}', space=sflag, size = 0x4, scoped, tag = 'scoped memory for tpu_custom_call.1']
    #allocation11 [shape = 'u8[512]{0}', space=smem, size = 0x200, scoped, tag = 'output window, operand 0, single buffered']
    %9 = vsyncpa [#allocation4], 0
    %10 = vsyncpa [#allocation7], 0
    %11 = vsyncpa [#allocation10], 0
    %12 = vsyncpa [#allocation5], 0
    // Predicated region
    $region2: #{tpu_custom_call.1} parent=1 // pred_check
      _
    $region3: #{tpu_custom_call.1} parent=1 // pred_check_branch
      %14 = sbr.rel (0) target = $region5
    $region4: #{tpu_custom_call.1} parent=1 // pred_region
      %16 = vsyncadd [#allocation4], 0
      %s17 = sshll.u32 %s0, 4
      %s18 = int_to_ptr.hbm [resolvable:$true] %s17
      %s19 = sshll.u32 [#allocation3], 4
      %s20 = int_to_ptr.vmem [resolvable:$true] %s19
      %25 = dma.hbm_to_vmem [thread:$0]  %s18, 256, %s20, [#allocation4], 128, 128, 8
    $region5: #{tpu_custom_call.1} parent=1 // pred_fallthru
      _
    // Predicated region
    $region6: #{tpu_custom_call.1} parent=1 // pred_check
      _
    $region7: #{tpu_custom_call.1} parent=1 // pred_check_branch
      %27 = sbr.rel (0) target = $region9
    $region8: #{tpu_custom_call.1} parent=1 // pred_region
      %29 = vsyncadd [#allocation7], 0
      %s30 = sshll.u32 %s1, 4
      %s31 = int_to_ptr.hbm [resolvable:$true] %s30
      %s32 = sshll.u32 [#allocation6], 4
      %s33 = int_to_ptr.vmem [resolvable:$true] %s32
      %38 = dma.hbm_to_vmem [thread:$0]  %s31, 256, %s33, [#allocation7], 128, 128, 8
    $region9: #{tpu_custom_call.1} parent=1 // pred_fallthru
      _
    // Predicated region
    $region10: #{tpu_custom_call.1} parent=1 // pred_check
      _
    $region11: #{tpu_custom_call.1} parent=1 // pred_check_branch
      %40 = sbr.rel (0) target = $region13
    $region12: #{tpu_custom_call.1} parent=1 // pred_region
      %42 = vsyncadd [#allocation7], 0
      %s43 = sshll.u32 %s2, 4
      %s44 = int_to_ptr.hbm [resolvable:$true] %s43
      %s45 = sshll.u32 [#allocation8], 4
      %s46 = int_to_ptr.vmem [resolvable:$true] %s45
      %51 = dma.hbm_to_vmem [thread:$0]  %s44, 256, %s46, [#allocation7], 128, 128, 8
    $region13: #{tpu_custom_call.1} parent=1 // pred_fallthru
      _
    // Predicated region
    $region14: #{tpu_custom_call.1} parent=1 // pred_check
      _
    $region15: #{tpu_custom_call.1} parent=1 // pred_check_branch
      %53 = sbr.rel (0) target = $region17
    $region16: #{tpu_custom_call.1} parent=1 // pred_region
      %55 = vsyncadd [#allocation10], 0
      %s56 = sshll.u32 %s3, 4
      %s57 = int_to_ptr.hbm [resolvable:$true] %s56
      %s58 = sshll.u32 [#allocation9], 4
      %s59 = int_to_ptr.vmem [resolvable:$true] %s58
      %64 = dma.hbm_to_vmem [thread:$0]  %s57, 256, %s59, [#allocation10], 128, 128, 8
    $region17: #{tpu_custom_call.1} parent=1 // pred_fallthru
      _
    // Predicated region
    $region18: #{tpu_custom_call.1} parent=1 // pred_check
      _
    $region19: #{tpu_custom_call.1} parent=1 // pred_check_branch
      %66 = sbr.rel (0) target = $region21
    $region20: #{tpu_custom_call.1} parent=1 // pred_region
      %68 = dma.done [#allocation4], 256
    $region21: #{tpu_custom_call.1} parent=1 // pred_fallthru
      _
    // Predicated region
    $region22: #{tpu_custom_call.1} parent=1 // pred_check
      _
    $region23: #{tpu_custom_call.1} parent=1 // pred_check_branch
      %70 = sbr.rel (0) target = $region25
    $region24: #{tpu_custom_call.1} parent=1 // pred_region
      %72 = dma.done [#allocation7], 256
    $region25: #{tpu_custom_call.1} parent=1 // pred_fallthru
      _
    // Predicated region
    $region26: #{tpu_custom_call.1} parent=1 // pred_check
      _
    $region27: #{tpu_custom_call.1} parent=1 // pred_check_branch
      %74 = sbr.rel (0) target = $region29
    $region28: #{tpu_custom_call.1} parent=1 // pred_region
      %76 = dma.done [#allocation7], 256
    $region29: #{tpu_custom_call.1} parent=1 // pred_fallthru
      _
    // Predicated region
    $region30: #{tpu_custom_call.1} parent=1 // pred_check
      _
    $region31: #{tpu_custom_call.1} parent=1 // pred_check_branch
      %78 = sbr.rel (0) target = $region33
    $region32: #{tpu_custom_call.1} parent=1 // pred_region
      %80 = dma.done [#allocation10], 256
    $region33: #{tpu_custom_call.1} parent=1 // pred_fallthru
      _
    %p81 = scmp.eq.s32.totalorder 0, 0
    // Predicated region
    $region34: #{tpu_custom_call.1} parent=1 // pred_check
      %p82 = pneg %p81
    $region35: #{tpu_custom_call.1} parent=1 // pred_check_branch
      %84 = sbr.rel (%p82) target = $region37
    $region36: #{tpu_custom_call.1} parent=1 // pred_region
      %s85 = scalar_lea.smem [#allocation2], 0
      %86 = sst [smem:[%s85]] 0.0
    $region37: #{tpu_custom_call.1} parent=1 // pred_fallthru
      _
    %v87 = vld [vmem:[#allocation3] sm:$0xff]
    %v88 = vld [vmem:[#allocation3 + $0x8] sm:$0xff]
    %v89 = vld [vmem:[#allocation6] sm:$0xff]
    %v90 = vld [vmem:[#allocation6 + $0x8] sm:$0xff]
    %v91 = vld [vmem:[#allocation8] sm:$0xff]
    %v92 = vld [vmem:[#allocation8 + $0x8] sm:$0xff]
    %v93 = vld [vmem:[#allocation9] sm:$0xff]
    %v94 = vld [vmem:[#allocation9 + $0x8] sm:$0xff]
    %v95 = vlaneseq
    %v96 = vshrl.u32 %v95, 7
    %v97 = vadd.s32 %v96, 8
    %v98 = vlaneseq
    %v99 = vand.u32 %v98, 127
    %s100 = smul.u32 0, 2048
    %s101 = scvt.s32.f32 %s100
    %v102 = vmul.u32 %v96, 128
    %v103 = vmul.u32 %v97, 128
    %v104 = vadd.s32 %v102, %v99
    %v105 = vadd.s32 %v103, %v99
    %v106 = vcvt.s32.f32 %v104
    %v107 = vcvt.s32.f32 %v105
    %v108 = vstv %s101
    %v109 = vadd.f32 %v108, %v106
    %v110 = vadd.f32 %v108, %v107
    %v111 = vmul.f32 %v109, 0.00390625
    %v112 = vmul.f32 %v110, 0.00390625
    %v113 = vfloor.f32 %v111
    %v114 = vfloor.f32 %v112
    %v115 = vmul.f32 %v113, 256.0
    %v116 = vmul.f32 %v114, 256.0
    %v117 = vsub.f32 %v109, %v115
    %v118 = vsub.f32 %v110, %v116
    %vm119 = vcmp.lt.f32.partialorder %v117, 0.0
    %vm120 = vcmp.lt.f32.partialorder %v118, 0.0
    %v121 = vadd.f32 %v117, 256.0
    %v122 = vadd.f32 %v118, 256.0
    %v123 = vsel %vm119, %v121, %v117
    %v124 = vsel %vm120, %v122, %v118
    %vm125 = vcmp.ge.f32.partialorder %v123, 256.0
    %vm126 = vcmp.ge.f32.partialorder %v124, 256.0
    %v127 = vsub.f32 %v123, 256.0
    %v128 = vsub.f32 %v124, 256.0
    %v129 = vsel %vm125, %v127, %v123
    %v130 = vsel %vm126, %v128, %v124
    %vm131 = vcmp.lt.f32.partialorder %v109, 512.0
    %vm132 = vcmp.lt.f32.partialorder %v110, 512.0
    %vm133 = vcmp.lt.f32.partialorder %v129, 32.0
    %vm134 = vcmp.lt.f32.partialorder %v130, 32.0
    %vm135 = vcmp.ge.f32.partialorder %v129, 32.0
    %vm136 = vcmp.ge.f32.partialorder %v130, 32.0
    %vm137 = vcmp.lt.f32.partialorder %v129, 64.0
    %vm138 = vcmp.lt.f32.partialorder %v130, 64.0
    %vm139 = vmand %vm135, %vm137
    %vm140 = vmand %vm136, %vm138
    %v141 = vrcp.pop %v89
    %v142 = vmul.f32 %v89, %v141
    %v143 = vsub.f32 1.0, %v142
    %v144 = vmul.f32 %v141, %v143
    %v145 = vadd.f32 %v141, %v144
    %vm146 = vweird.f32 %v89
    %vm147 = vweird.f32 %v141
    %vm148 = vmor %vm146, %vm147
    %v149 = vsel %vm148, %v141, %v145
    %v150 = vand.u32 2147483647, %v89
    %vm151 = vcmp.eq.f32.partialorder %v150, 8.507059e+37
    %v152 = vand.u32 %v89, 2147483648
    %v153 = vor.u32 1.1754944e-38, %v152
    %v154 = vsel %vm151, %v153, %v149
    %v155 = vmul.f32 1.0, %v154
    %v156 = vrcp.pop %v90
    %v157 = vmul.f32 %v90, %v156
    %v158 = vsub.f32 1.0, %v157
    %v159 = vmul.f32 %v156, %v158
    %v160 = vadd.f32 %v156, %v159
    %vm161 = vweird.f32 %v90
    %vm162 = vweird.f32 %v156
    %vm163 = vmor %vm161, %vm162
    %v164 = vsel %vm163, %v156, %v160
    %v165 = vand.u32 2147483647, %v90
    %vm166 = vcmp.eq.f32.partialorder %v165, 8.507059e+37
    %v167 = vand.u32 %v90, 2147483648
    %v168 = vor.u32 1.1754944e-38, %v167
    %v169 = vsel %vm166, %v168, %v164
    %v170 = vmul.f32 1.0, %v169
    %v171 = vmul.f32 %v93, %v93
    %v172 = vmul.f32 %v94, %v94
    %v173 = vsub.f32 %v91, %v87
    %v174 = vsub.f32 %v92, %v88
    %v175 = vmul.f32 %v93, %v155
    %v176 = vmul.f32 %v94, %v170
    %v177 = vsel %vm139, %v93, 1.0
    %v178 = vsel %vm140, %v94, 1.0
    %v179 = vmul.f32 %v175, %v177
    %v180 = vmul.f32 %v176, %v178
    %v181 = vlog2.pop %v179
    %v182 = vmul.f32 %v181, 0.6931472
    %v183 = vlog2.pop %v180
    %v184 = vmul.f32 %v183, 0.6931472
    %v185 = vsub.f32 0.0, %v182
    %v186 = vsub.f32 0.0, %v184
    %v187 = vsub.f32 %v185, 0.5
    %v188 = vsub.f32 %v186, 0.5
    %v189 = vmul.f32 %v173, %v173
    %v190 = vmul.f32 %v174, %v174
    %v191 = vadd.f32 %v171, %v189
    %v192 = vadd.f32 %v172, %v190
    %v193 = vmul.f32 %v155, %v155
    %v194 = vmul.f32 %v170, %v170
    %v195 = vmul.f32 %v193, 0.5
    %v196 = vmul.f32 %v194, 0.5
    %v197 = vmul.f32 %v191, %v195
    %v198 = vmul.f32 %v192, %v196
    %v199 = vadd.f32 %v187, %v197
    %v200 = vadd.f32 %v188, %v198
    %v201 = vmul.f32 %v171, 0.5
    %v202 = vmul.f32 %v172, 0.5
    %v203 = vsel %vm139, %v201, 0.0
    %v204 = vsel %vm140, %v202, 0.0
    %v205 = vadd.f32 %v199, %v203
    %v206 = vadd.f32 %v200, %v204
    %v207 = vmul.f32 %v91, %v91
    %v208 = vmul.f32 %v92, %v92
    %v209 = vmul.f32 %v207, 0.5
    %v210 = vmul.f32 %v208, 0.5
    %v211 = vsub.f32 %v209, 0.5
    %v212 = vsub.f32 %v210, 0.5
    %v213 = vsel %vm133, %v211, %v205
    %v214 = vsel %vm134, %v212, %v206
    %v215 = vsel %vm131, %v213, 0.0
    %v216 = vsel %vm132, %v214, 0.0
    %s217 = sld [smem:[#allocation2]]
    %v218 = vadd.f32 %v215, %v216
    %219 = vadd.xlane.f32.xlu0 %v218
    %v220 = vpop.xlane.xlu0 %219
    %v221 = vrot.slane %v220, 4
    %v222 = vadd.f32 %v220, %v221
    %v223 = vrot.slane %v222, 2
    %v224 = vadd.f32 %v222, %v223
    %v225 = vrot.slane %v224, 1
    %v226 = vadd.f32 %v224, %v225
    %s227 = vtos %v226
    %s228 = sadd.f32 %s217, %s227
    %s229 = scalar_lea.smem [#allocation2], 0
    %230 = sst [smem:[%s229]] %s228
    // Predicated region
    $region38: #{tpu_custom_call.1} parent=1 // pred_check
      %p231 = pneg %p81
    $region39: #{tpu_custom_call.1} parent=1 // pred_check_branch
      %233 = sbr.rel (%p231) target = $region41
    $region40: #{tpu_custom_call.1} parent=1 // pred_region
      %s234 = sld [smem:[#allocation2]]
      %s235 = smul.f32 %s234, 0.0625
      %s236 = scalar_lea.smem [#allocation11], 0
      %237 = sst [smem:[%s236]] %s235
    $region41: #{tpu_custom_call.1} parent=1 // pred_fallthru
      _
    // Predicated region
    $region42: #{tpu_custom_call.1} parent=1 // pred_check
      _
    $region43: #{tpu_custom_call.1} parent=1 // pred_check_branch
      %239 = sbr.rel (0) target = $region45
    $region44: #{tpu_custom_call.1} parent=1 // pred_region
      %241 = vsyncadd [#allocation5], 0
      %s243 = sshll.u32 %s4, 4
      %s244 = int_to_ptr.hbm [resolvable:$true] %s243
      %246 = dma.smem_to_hbm [#allocation11], 16, %s244, [#allocation5]
    $region45: #{tpu_custom_call.1} parent=1 // pred_fallthru
      _
    // Predicated region
    $region46: #{tpu_custom_call.1} parent=1 // pred_check
      _
    $region47: #{tpu_custom_call.1} parent=1 // pred_check_branch
      %248 = sbr.rel (0) target = $region49
    $region48: #{tpu_custom_call.1} parent=1 // pred_region
      %250 = dma.done [#allocation5], 16
    $region49: #{tpu_custom_call.1} parent=1 // pred_fallthru
      _
    %251 = sfence
    %252 = vsyncpa [#allocation4], 1
    %253 = vsyncpa [#allocation7], 1
    %254 = vsyncpa [#allocation10], 1
    %255 = vsyncpa [#allocation5], 1

</llo_original>
